<compile_context>
chip_gen: v5e
topology: v5e:2x2
jax: 0.10.0
libtpu: 0.0.40
codegen_flags: <defaults>
</compile_context>

<pallas_src>
import jax
import jax.numpy as jnp
from jax.experimental import pallas as pl
from jax.experimental.pallas import tpu as pltpu


def _round_up(x, m):
    return (x + m - 1) // m * m


# ------------------------------ fused model kernel ---------------------------
def model_kernel(tok_ref, emb_ref, w1_ref, b1_ref, w2_ref, b2_ref,
                 w3_ref, b3_ref, out_ref, acc_ref):
    """Grid = (batch tiles [parallel], vocab tiles [arbitrary reduction]).

      tok_ref : (TM, L)         int32 token ids (padded rows arbitrary)
      emb_ref : (TV, D_pad)     bf16 embedding-table tile (zero-padded)
      w1_ref  : (D_pad, D_pad)  bf16 fc1 weight, stored (in, out)
      b1_ref  : (1, D_pad)      f32
      w2_ref  : (D_pad, H_pad)  bf16 fc2 weight, stored (in, out)
      b2_ref  : (1, H_pad)      f32
      w3_ref  : (H_pad, O_pad)  bf16 fc3 weight, real logit in column 0
      b3_ref  : (1, O_pad)      f32
      out_ref : (TM, O_pad)     f32 logits slab (lane-dense, 128 wide)
      acc_ref : (TM, D_pad)     f32 scratch: running sum of embeddings
    """
    k = pl.program_id(1)

    @pl.when(k == 0)
    def _():
        acc_ref[...] = jnp.zeros_like(acc_ref)

    toks = tok_ref[...]                                   # (TM, L) int32
    tm, seq_len = toks.shape
    tv = emb_ref.shape[0]
    v_base = k * tv                                       # first vocab id of this tile

    # --- EmbeddingBag(mean): one-hot-count chunk @ table tile (MXU) ----------
    lane_ids = jax.lax.broadcasted_iota(jnp.int32, (tm, tv), 1) + v_base

    n_parts = min(4, seq_len)                             # break VALU dep chain
    parts = [jnp.zeros((tm, tv), jnp.int32) for _ in range(n_parts)]
    for l in range(seq_len):                              # static unroll, L is small
        hit = (toks[:, l:l + 1] == lane_ids).astype(jnp.int32)
        parts[l % n_parts] = parts[l % n_parts] + hit
    counts = parts[0]
    for p in parts[1:]:
        counts = counts + p

    # counts <= L <= 256 -> exact in bf16; single cast at the matmul input.
    acc_ref[...] += jnp.dot(counts.astype(jnp.bfloat16), emb_ref[...],
                            preferred_element_type=jnp.float32)   # (TM, D_pad) f32

    # --- after the last vocab tile: run the MLP head --------------------------
    @pl.when(k == pl.num_programs(1) - 1)
    def _():
        # 1/L scale applied to the small (TM, D_pad) result, not the (TM, V) counts.
        embedded = (acc_ref[...] * (1.0 / seq_len)).astype(jnp.bfloat16)

        # fc1 + ReLU  (dropout omitted: inference)
        h1 = jnp.maximum(
            jnp.dot(embedded, w1_ref[...], preferred_element_type=jnp.float32)
            + b1_ref[...], 0.0)

        # fc2 + ReLU  (dropout omitted: inference)
        h2 = jnp.maximum(
            jnp.dot(h1.astype(jnp.bfloat16), w2_ref[...],
                    preferred_element_type=jnp.float32) + b2_ref[...], 0.0)

        # fc3: lane-dense padded output; real logit in column 0.
        out_ref[...] = (
            jnp.dot(h2.astype(jnp.bfloat16), w3_ref[...],
                    preferred_element_type=jnp.float32) + b3_ref[...])


# ------------------------------ wrapper ---------------------------------------
def _vmem_budget_bytes(tm, tv, seq_len, d_pad, h_pad, o_pad):
    """Double-buffered per-step tiles + scratch + headroom (bytes)."""
    tiles = [
        tm * seq_len * 4,        # tokens (int32)
        tv * d_pad * 2,          # emb tile (bf16)
        d_pad * d_pad * 2,       # w1 (bf16)
        8 * d_pad * 4,           # b1 (f32, sublane-padded)
        d_pad * h_pad * 2,       # w2 (bf16)
        8 * h_pad * 4,           # b2
        h_pad * o_pad * 2,       # w3 (bf16)
        8 * o_pad * 4,           # b3
        tm * o_pad * 4,          # output slab (f32)
    ]
    scratch = tm * d_pad * 4     # f32 accumulator
    computed = 2 * sum(tiles) + scratch + (4 << 20)       # 2x buffers + headroom
    return max(computed, 16 << 20)


def text_classification_forward(tokens, padded):
    """tokens: (B, L) int32 -> (B,) float32 logits."""
    B, L = tokens.shape
    V_pad, D_pad = padded["emb"].shape
    H_pad = padded["w2"].shape[1]
    O_pad = padded["w3"].shape[1]
    TV = padded["TV"]

    # Batch tile: 8 for tiny batches, up to 256 to fill the 256-wide MXU at scale.
    TM = min(256, _round_up(B, 8))
    B_pad = _round_up(B, TM)
    toks_p = jnp.zeros((B_pad, L), jnp.int32).at[:B, :].set(tokens)

    grid = (B_pad // TM, V_pad // TV)
    vmem_limit = _vmem_budget_bytes(TM, TV, L, D_pad, H_pad, O_pad)

    out = pl.pallas_call(
        model_kernel,
        out_shape=jax.ShapeDtypeStruct((B_pad, O_pad), jnp.float32),
        grid_spec=pltpu.PrefetchScalarGridSpec(
            num_scalar_prefetch=0,
            grid=grid,
            in_specs=[
                pl.BlockSpec((TM, L), lambda i, k: (i, 0)),        # tokens
                pl.BlockSpec((TV, D_pad), lambda i, k: (k, 0)),    # emb tile
                pl.BlockSpec((D_pad, D_pad), lambda i, k: (0, 0)), # w1 (resident)
                pl.BlockSpec((1, D_pad), lambda i, k: (0, 0)),     # b1
                pl.BlockSpec((D_pad, H_pad), lambda i, k: (0, 0)), # w2
                pl.BlockSpec((1, H_pad), lambda i, k: (0, 0)),     # b2
                pl.BlockSpec((H_pad, O_pad), lambda i, k: (0, 0)), # w3
                pl.BlockSpec((1, O_pad), lambda i, k: (0, 0)),     # b3
            ],
            out_specs=pl.BlockSpec((TM, O_pad), lambda i, k: (i, 0)),
            scratch_shapes=[pltpu.VMEM((TM, D_pad), jnp.float32)],
        ),
        compiler_params=pltpu.CompilerParams(
            dimension_semantics=("parallel", "arbitrary"),
            vmem_limit_bytes=vmem_limit,
        ),
    )(toks_p, padded["emb"], padded["w1"], padded["b1"],
      padded["w2"], padded["b2"], padded["w3"], padded["b3"])

    return out[:B, 0]                                     # (B,) == .squeeze()


# ------------------------------ parameters -----------------------------------
def make_params(key, vocab_size, embed_dim):
    """Faithful to TextClassificationModel.init_weights (uniform +-0.5, zero biases).
    Linear weights stored transposed as (in, out)."""
    initrange = 0.5
    hidden = embed_dim // 2
    k_emb, k1, k2, k3 = jax.random.split(key, 4)

    def uni(k, shape):
        return jax.random.uniform(k, shape, jnp.float32, -initrange, initrange)

    return {
        "emb": uni(k_emb, (vocab_size, embed_dim)),
        "w1": uni(k1, (embed_dim, embed_dim)),
        "b1": jnp.zeros((embed_dim,), jnp.float32),
        "w2": uni(k2, (embed_dim, hidden)),
        "b2": jnp.zeros((hidden,), jnp.float32),
        "w3": uni(k3, (hidden, 1)),
        "b3": jnp.zeros((1,), jnp.float32),
    }


def pad_params(p, *, max_vocab_tile=512):
    """Zero-pad to TPU tiles; matmul operands stored in bf16, biases in f32."""
    V, D = p["emb"].shape
    H = p["w2"].shape[1]
    TV = min(max_vocab_tile, _round_up(V, 128))   # vocab reduction tile
    V_pad = _round_up(V, TV)
    D_pad = _round_up(D, 128)
    H_pad = _round_up(H, 128)
    O_pad = 128                                   # lane-dense output slab

    def pad2(a, rows, cols, dtype):
        out = jnp.zeros((rows, cols), dtype)
        return out.at[:a.shape[0], :a.shape[1]].set(a.astype(dtype))

    return {
        "emb": pad2(p["emb"], V_pad, D_pad, jnp.bfloat16),
        "w1": pad2(p["w1"], D_pad, D_pad, jnp.bfloat16),
        "b1": pad2(p["b1"][None, :], 1, D_pad, jnp.float32),
        "w2": pad2(p["w2"], D_pad, H_pad, jnp.bfloat16),
        "b2": pad2(p["b2"][None, :], 1, H_pad, jnp.float32),
        "w3": pad2(p["w3"], H_pad, O_pad, jnp.bfloat16),
        "b3": pad2(p["b3"][None, :], 1, O_pad, jnp.float32),
        "TV": TV,
    }


# ------------------------------ reference (plain JAX) -------------------------
def reference_forward(tokens, p):
    emb = jnp.take(p["emb"], tokens, axis=0).mean(axis=1)     # EmbeddingBag(mean)
    h1 = jax.nn.relu(emb @ p["w1"] + p["b1"])
    h2 = jax.nn.relu(h1 @ p["w2"] + p["b2"])
    return (h2 @ p["w3"] + p["b3"]).squeeze()


if __name__ == "__main__":
    VOCAB, EMBED_DIM = 100, 32
    B, L = 4, 8                                             # batch of 4 bags, 8 tokens each

    key = jax.random.PRNGKey(0)
    pkey, tkey = jax.random.split(key)
    params = make_params(pkey, VOCAB, EMBED_DIM)
    padded = pad_params(params)
    tokens = jax.random.randint(tkey, (B, L), 0, VOCAB, dtype=jnp.int32)

    logits = text_classification_forward(tokens, padded)
    jax.block_until_ready(logits)
    assert logits.shape == (B,), logits.shape

    # Reference uses the same bf16-rounded weights the kernel consumes.
    def bf16rt(a):
        return a.astype(jnp.bfloat16).astype(jnp.float32)

    ref_params = {
        "emb": bf16rt(params["emb"]),
        "w1": bf16rt(params["w1"]), "b1": params["b1"],
        "w2": bf16rt(params["w2"]), "b2": params["b2"],
        "w3": bf16rt(params["w3"]), "b3": params["b3"],
    }
    ref = reference_forward(tokens, ref_params)
    assert jnp.allclose(logits, ref, atol=1e-2, rtol=1e-2), (logits, ref)

    print("KERNEL_OK")
</pallas_src>

<mosaic_0001>
module attributes {stable_mosaic.version = 11 : i64} {
  func.func @model_kernel(%arg0: i32, %arg1: i32, %arg2: memref<8x8xi32, #tpu.memory_space<vmem>>, %arg3: memref<128x128xbf16, #tpu.memory_space<vmem>>, %arg4: memref<128x128xbf16, #tpu.memory_space<vmem>>, %arg5: memref<1x128xf32, #tpu.memory_space<vmem>>, %arg6: memref<128x128xbf16, #tpu.memory_space<vmem>>, %arg7: memref<1x128xf32, #tpu.memory_space<vmem>>, %arg8: memref<128x128xbf16, #tpu.memory_space<vmem>>, %arg9: memref<1x128xf32, #tpu.memory_space<vmem>>, %arg10: memref<8x128xf32, #tpu.memory_space<vmem>>, %arg11: memref<8x128xf32, #tpu.memory_space<vmem>>) attributes {dimension_semantics = [#tpu.dimension_semantics<parallel>, #tpu.dimension_semantics<arbitrary>], iteration_bounds = array<i64: 1, 1>, scalar_prefetch = 0 : i64, scratch_operands = 1 : i64, tpu.core_type = #tpu.core_type<tc>, window_params = [{transform_indices = @transform_0, window_bounds = array<i64: 8, 8>}, {transform_indices = @transform_1, window_bounds = array<i64: 128, 128>}, {pipeline_mode = #tpu.pipeline_mode<synchronous>, transform_indices = @transform_2, window_bounds = array<i64: 128, 128>}, {pipeline_mode = #tpu.pipeline_mode<synchronous>, transform_indices = @transform_3, window_bounds = array<i64: 1, 128>}, {pipeline_mode = #tpu.pipeline_mode<synchronous>, transform_indices = @transform_4, window_bounds = array<i64: 128, 128>}, {pipeline_mode = #tpu.pipeline_mode<synchronous>, transform_indices = @transform_5, window_bounds = array<i64: 1, 128>}, {pipeline_mode = #tpu.pipeline_mode<synchronous>, transform_indices = @transform_6, window_bounds = array<i64: 128, 128>}, {pipeline_mode = #tpu.pipeline_mode<synchronous>, transform_indices = @transform_7, window_bounds = array<i64: 1, 128>}, {transform_indices = @transform_8, window_bounds = array<i64: 8, 128>}]} {
    %c0_i32 = arith.constant 0 : i32
    %0 = arith.cmpi eq, %arg1, %c0_i32 : i32
    %1 = arith.extui %0 : i1 to i32
    %c0_i32_0 = arith.constant 0 : i32
    %2 = arith.cmpi ne, %1, %c0_i32_0 : i32
    scf.if %2 {
      %cst_14 = arith.constant 0.000000e+00 : f32
      %64 = vector.broadcast %cst_14 : f32 to vector<8x128xf32>
      %c0_15 = arith.constant 0 : index
      %c0_16 = arith.constant 0 : index
      %65 = vector.load %arg11[%c0_15, %c0_16] : memref<8x128xf32, #tpu.memory_space<vmem>>, vector<8x128xf32>
      tpu.vector_store %arg11[%c0_15, %c0_16], %64 {strides = array<i32>} : memref<8x128xf32, #tpu.memory_space<vmem>>, vector<8x128xf32>,
    } else {
    }
    %c0 = arith.constant 0 : index
    %c0_1 = arith.constant 0 : index
    %3 = vector.load %arg2[%c0, %c0_1] : memref<8x8xi32, #tpu.memory_space<vmem>>, vector<8x8xi32>
    %c128_i32 = arith.constant 128 : i32
    %4 = arith.muli %arg1, %c128_i32 : i32
    %5 = tpu.iota {dimensions = array<i32: 1>} : vector<8x128xi32>
    %6 = vector.broadcast %4 : i32 to vector<8x128xi32>
    %7 = arith.addi %5, %6 : vector<8x128xi32>
    %c0_i32_2 = arith.constant 0 : i32
    %8 = vector.broadcast %c0_i32_2 : i32 to vector<8x128xi32>
    %c0_i32_3 = arith.constant 0 : i32
    %9 = vector.broadcast %c0_i32_3 : i32 to vector<8x128xi32>
    %c0_i32_4 = arith.constant 0 : i32
    %10 = vector.broadcast %c0_i32_4 : i32 to vector<8x128xi32>
    %c0_i32_5 = arith.constant 0 : i32
    %11 = vector.broadcast %c0_i32_5 : i32 to vector<8x128xi32>
    %12 = vector.extract_strided_slice %3 {offsets = [0, 0], sizes = [8, 1], strides = [1, 1]} : vector<8x8xi32> to vector<8x1xi32>
    %13 = vector.broadcast %12 : vector<8x1xi32> to vector<8x128xi32>
    %14 = arith.cmpi eq, %13, %7 : vector<8x128xi32>
    %15 = arith.extui %14 : vector<8x128xi1> to vector<8x128xi32>
    %16 = arith.addi %8, %15 : vector<8x128xi32>
    %17 = vector.extract_strided_slice %3 {offsets = [0, 1], sizes = [8, 1], strides = [1, 1]} : vector<8x8xi32> to vector<8x1xi32>
    %18 = vector.broadcast %17 : vector<8x1xi32> to vector<8x128xi32>
    %19 = arith.cmpi eq, %18, %7 : vector<8x128xi32>
    %20 = arith.extui %19 : vector<8x128xi1> to vector<8x128xi32>
    %21 = arith.addi %9, %20 : vector<8x128xi32>
    %22 = vector.extract_strided_slice %3 {offsets = [0, 2], sizes = [8, 1], strides = [1, 1]} : vector<8x8xi32> to vector<8x1xi32>
    %23 = vector.broadcast %22 : vector<8x1xi32> to vector<8x128xi32>
    %24 = arith.cmpi eq, %23, %7 : vector<8x128xi32>
    %25 = arith.extui %24 : vector<8x128xi1> to vector<8x128xi32>
    %26 = arith.addi %10, %25 : vector<8x128xi32>
    %27 = vector.extract_strided_slice %3 {offsets = [0, 3], sizes = [8, 1], strides = [1, 1]} : vector<8x8xi32> to vector<8x1xi32>
    %28 = vector.broadcast %27 : vector<8x1xi32> to vector<8x128xi32>
    %29 = arith.cmpi eq, %28, %7 : vector<8x128xi32>
    %30 = arith.extui %29 : vector<8x128xi1> to vector<8x128xi32>
    %31 = arith.addi %11, %30 : vector<8x128xi32>
    %32 = vector.extract_strided_slice %3 {offsets = [0, 4], sizes = [8, 1], strides = [1, 1]} : vector<8x8xi32> to vector<8x1xi32>
    %33 = vector.broadcast %32 : vector<8x1xi32> to vector<8x128xi32>
    %34 = arith.cmpi eq, %33, %7 : vector<8x128xi32>
    %35 = arith.extui %34 : vector<8x128xi1> to vector<8x128xi32>
    %36 = arith.addi %16, %35 : vector<8x128xi32>
    %37 = vector.extract_strided_slice %3 {offsets = [0, 5], sizes = [8, 1], strides = [1, 1]} : vector<8x8xi32> to vector<8x1xi32>
    %38 = vector.broadcast %37 : vector<8x1xi32> to vector<8x128xi32>
    %39 = arith.cmpi eq, %38, %7 : vector<8x128xi32>
    %40 = arith.extui %39 : vector<8x128xi1> to vector<8x128xi32>
    %41 = arith.addi %21, %40 : vector<8x128xi32>
    %42 = vector.extract_strided_slice %3 {offsets = [0, 6], sizes = [8, 1], strides = [1, 1]} : vector<8x8xi32> to vector<8x1xi32>
    %43 = vector.broadcast %42 : vector<8x1xi32> to vector<8x128xi32>
    %44 = arith.cmpi eq, %43, %7 : vector<8x128xi32>
    %45 = arith.extui %44 : vector<8x128xi1> to vector<8x128xi32>
    %46 = arith.addi %26, %45 : vector<8x128xi32>
    %47 = vector.extract_strided_slice %3 {offsets = [0, 7], sizes = [8, 1], strides = [1, 1]} : vector<8x8xi32> to vector<8x1xi32>
    %48 = vector.broadcast %47 : vector<8x1xi32> to vector<8x128xi32>
    %49 = arith.cmpi eq, %48, %7 : vector<8x128xi32>
    %50 = arith.extui %49 : vector<8x128xi1> to vector<8x128xi32>
    %51 = arith.addi %31, %50 : vector<8x128xi32>
    %52 = arith.addi %36, %41 : vector<8x128xi32>
    %53 = arith.addi %52, %46 : vector<8x128xi32>
    %54 = arith.addi %53, %51 : vector<8x128xi32>
    %c0_6 = arith.constant 0 : index
    %c0_7 = arith.constant 0 : index
    %55 = vector.load %arg11[%c0_6, %c0_7] : memref<8x128xf32, #tpu.memory_space<vmem>>, vector<8x128xf32>
    %56 = arith.sitofp %54 : vector<8x128xi32> to vector<8x128xbf16>
    %c0_8 = arith.constant 0 : index
    %c0_9 = arith.constant 0 : index
    %57 = vector.load %arg3[%c0_8, %c0_9] : memref<128x128xbf16, #tpu.memory_space<vmem>>, vector<128x128xbf16>
    %cst = arith.constant dense<0.000000e+00> : vector<8x128xf32>
    %58 = tpu.matmul %56, %57, %cst {dimension_numbers = #tpu.dot_dimension_numbers<[1], [0], [0], [1], [0, 0, 1, 1], [], []>} : vector<8x128xbf16>, vector<128x128xbf16>, vector<8x128xf32> -> vector<8x128xf32>
    %59 = arith.addf %55, %58 : vector<8x128xf32>
    %c0_10 = arith.constant 0 : index
    %c0_11 = arith.constant 0 : index
    %60 = vector.load %arg11[%c0_10, %c0_11] : memref<8x128xf32, #tpu.memory_space<vmem>>, vector<8x128xf32>
    tpu.vector_store %arg11[%c0_10, %c0_11], %59 {strides = array<i32>} : memref<8x128xf32, #tpu.memory_space<vmem>>, vector<8x128xf32>,
    %c0_i32_12 = arith.constant 0 : i32
    %61 = arith.cmpi eq, %arg1, %c0_i32_12 : i32
    %62 = arith.extui %61 : i1 to i32
    %c0_i32_13 = arith.constant 0 : i32
    %63 = arith.cmpi ne, %62, %c0_i32_13 : i32
    scf.if %63 {
      %c0_14 = arith.constant 0 : index
      %c0_15 = arith.constant 0 : index
      %64 = vector.load %arg11[%c0_14, %c0_15] : memref<8x128xf32, #tpu.memory_space<vmem>>, vector<8x128xf32>
      %cst_16 = arith.constant 1.250000e-01 : f32
      %65 = vector.broadcast %cst_16 : f32 to vector<8x128xf32>
      %66 = arith.mulf %64, %65 : vector<8x128xf32>
      %67 = arith.truncf %66 : vector<8x128xf32> to vector<8x128xbf16>
      %c0_17 = arith.constant 0 : index
      %c0_18 = arith.constant 0 : index
      %68 = vector.load %arg4[%c0_17, %c0_18] : memref<128x128xbf16, #tpu.memory_space<vmem>>, vector<128x128xbf16>
      %cst_19 = arith.constant dense<0.000000e+00> : vector<8x128xf32>
      %69 = tpu.matmul %67, %68, %cst_19 {dimension_numbers = #tpu.dot_dimension_numbers<[1], [0], [0], [1], [0, 0, 1, 1], [], []>} : vector<8x128xbf16>, vector<128x128xbf16>, vector<8x128xf32> -> vector<8x128xf32>
      %c0_20 = arith.constant 0 : index
      %c0_21 = arith.constant 0 : index
      %70 = vector.load %arg5[%c0_20, %c0_21] : memref<1x128xf32, #tpu.memory_space<vmem>>, vector<1x128xf32>
      %71 = vector.broadcast %70 : vector<1x128xf32> to vector<8x128xf32>
      %72 = arith.addf %69, %71 : vector<8x128xf32>
      %cst_22 = arith.constant 0.000000e+00 : f32
      %73 = vector.broadcast %cst_22 : f32 to vector<8x128xf32>
      %74 = arith.maximumf %72, %73 : vector<8x128xf32>
      %75 = arith.truncf %74 : vector<8x128xf32> to vector<8x128xbf16>
      %c0_23 = arith.constant 0 : index
      %c0_24 = arith.constant 0 : index
      %76 = vector.load %arg6[%c0_23, %c0_24] : memref<128x128xbf16, #tpu.memory_space<vmem>>, vector<128x128xbf16>
      %cst_25 = arith.constant dense<0.000000e+00> : vector<8x128xf32>
      %77 = tpu.matmul %75, %76, %cst_25 {dimension_numbers = #tpu.dot_dimension_numbers<[1], [0], [0], [1], [0, 0, 1, 1], [], []>} : vector<8x128xbf16>, vector<128x128xbf16>, vector<8x128xf32> -> vector<8x128xf32>
      %c0_26 = arith.constant 0 : index
      %c0_27 = arith.constant 0 : index
      %78 = vector.load %arg7[%c0_26, %c0_27] : memref<1x128xf32, #tpu.memory_space<vmem>>, vector<1x128xf32>
      %79 = vector.broadcast %78 : vector<1x128xf32> to vector<8x128xf32>
      %80 = arith.addf %77, %79 : vector<8x128xf32>
      %cst_28 = arith.constant 0.000000e+00 : f32
      %81 = vector.broadcast %cst_28 : f32 to vector<8x128xf32>
      %82 = arith.maximumf %80, %81 : vector<8x128xf32>
      %83 = arith.truncf %82 : vector<8x128xf32> to vector<8x128xbf16>
      %c0_29 = arith.constant 0 : index
      %c0_30 = arith.constant 0 : index
      %84 = vector.load %arg8[%c0_29, %c0_30] : memref<128x128xbf16, #tpu.memory_space<vmem>>, vector<128x128xbf16>
      %cst_31 = arith.constant dense<0.000000e+00> : vector<8x128xf32>
      %85 = tpu.matmul %83, %84, %cst_31 {dimension_numbers = #tpu.dot_dimension_numbers<[1], [0], [0], [1], [0, 0, 1, 1], [], []>} : vector<8x128xbf16>, vector<128x128xbf16>, vector<8x128xf32> -> vector<8x128xf32>
      %c0_32 = arith.constant 0 : index
      %c0_33 = arith.constant 0 : index
      %86 = vector.load %arg9[%c0_32, %c0_33] : memref<1x128xf32, #tpu.memory_space<vmem>>, vector<1x128xf32>
      %87 = vector.broadcast %86 : vector<1x128xf32> to vector<8x128xf32>
      %88 = arith.addf %85, %87 : vector<8x128xf32>
      %c0_34 = arith.constant 0 : index
      %c0_35 = arith.constant 0 : index
      %89 = vector.load %arg10[%c0_34, %c0_35] : memref<8x128xf32, #tpu.memory_space<vmem>>, vector<8x128xf32>
      tpu.vector_store %arg10[%c0_34, %c0_35], %88 {strides = array<i32>} : memref<8x128xf32, #tpu.memory_space<vmem>>, vector<8x128xf32>,
    } else {
    }
    return
  }
  func.func @transform_0(%arg0: i32, %arg1: i32) -> (i32, i32) {
    %c0_i32 = arith.constant 0 : i32
    %c0_i32_0 = arith.constant 0 : i32
    return %arg0, %c0_i32 : i32, i32
  }
  func.func @transform_1(%arg0: i32, %arg1: i32) -> (i32, i32) {
    %c0_i32 = arith.constant 0 : i32
    %c0_i32_0 = arith.constant 0 : i32
    return %arg1, %c0_i32 : i32, i32
  }
  func.func @transform_2(%arg0: i32, %arg1: i32) -> (i32, i32) {
    %c0_i32 = arith.constant 0 : i32
    %c0_i32_0 = arith.constant 0 : i32
    %c0_i32_1 = arith.constant 0 : i32
    return %c0_i32, %c0_i32_0 : i32, i32
  }
  func.func @transform_3(%arg0: i32, %arg1: i32) -> (i32, i32) {
    %c0_i32 = arith.constant 0 : i32
    %c0_i32_0 = arith.constant 0 : i32
    %c0_i32_1 = arith.constant 0 : i32
    return %c0_i32, %c0_i32_0 : i32, i32
  }
  func.func @transform_4(%arg0: i32, %arg1: i32) -> (i32, i32) {
    %c0_i32 = arith.constant 0 : i32
    %c0_i32_0 = arith.constant 0 : i32
    %c0_i32_1 = arith.constant 0 : i32
    return %c0_i32, %c0_i32_0 : i32, i32
  }
  func.func @transform_5(%arg0: i32, %arg1: i32) -> (i32, i32) {
    %c0_i32 = arith.constant 0 : i32
    %c0_i32_0 = arith.constant 0 : i32
    %c0_i32_1 = arith.constant 0 : i32
    return %c0_i32, %c0_i32_0 : i32, i32
  }
  func.func @transform_6(%arg0: i32, %arg1: i32) -> (i32, i32) {
    %c0_i32 = arith.constant 0 : i32
    %c0_i32_0 = arith.constant 0 : i32
    %c0_i32_1 = arith.constant 0 : i32
    return %c0_i32, %c0_i32_0 : i32, i32
  }
  func.func @transform_7(%arg0: i32, %arg1: i32) -> (i32, i32) {
    %c0_i32 = arith.constant 0 : i32
    %c0_i32_0 = arith.constant 0 : i32
    %c0_i32_1 = arith.constant 0 : i32
    return %c0_i32, %c0_i32_0 : i32, i32
  }
  func.func @transform_8(%arg0: i32, %arg1: i32) -> (i32, i32) {
    %c0_i32 = arith.constant 0 : i32
    %c0_i32_0 = arith.constant 0 : i32
    return %arg0, %c0_i32 : i32, i32
  }
}

</mosaic_0001>

<llo_original>
// kernel: tpu_custom_call.1
$region0: #{tpu_custom_call.1}
  #allocation0 [shape = 'u32[]', space=smem, size = 0x4, offset = 0x4, fixed_abs, tag = 'smem constant byte address 0x4 - core index']
  #allocation1 [shape = 'u32[72,128]{1,0:T(1,128)}', space=vmem, size = 0x9000, scoped, tag = 'internal scratch']
  #allocation2 [shape = 'f32[8,128]{1,0:T(8,128)}', space=vmem, size = 0x1000, scoped, tag = 'scratch operand']
  %s0 = inlined_call_operand.hbm [shape: s32[8,8], index: 0, kind: input, shape index: {}]
  %s1 = inlined_call_operand.hbm [shape: bf16[128,128], index: 1, kind: input, shape index: {}]
  %s2 = inlined_call_operand.hbm [shape: bf16[128,128], index: 2, kind: input, shape index: {}]
  %s3 = inlined_call_operand.vmem [shape: f32[1,128], index: 3, kind: input, shape index: {}]
  %s4 = inlined_call_operand.hbm [shape: bf16[128,128], index: 4, kind: input, shape index: {}]
  %s5 = inlined_call_operand.vmem [shape: f32[1,128], index: 5, kind: input, shape index: {}]
  %s6 = inlined_call_operand.hbm [shape: bf16[128,128], index: 6, kind: input, shape index: {}]
  %s7 = inlined_call_operand.vmem [shape: f32[1,128], index: 7, kind: input, shape index: {}]
  %s8 = inlined_call_operand.hbm [shape: f32[8,128], index: 8, kind: output, shape index: {}]
  %s9 = sld [smem:[#allocation0]]
  $region70: #{tpu_custom_call.1} parent=0
    _
  %s11 = ssub.s32 1, %s9
  %s12 = scalar_select 0, %s11, %s9
  $region1: #{tpu_custom_call.1} parent=0
    #allocation3 [shape = 'u8[4096]{0}', space=vmem, size = 0x1000, scoped, tag = 'input window, operand 0, single buffered']
    #allocation4 [shape = 's32[1]{0}', space=sflag, size = 0x4, scoped, tag = 'scoped memory for tpu_custom_call.1']
    #allocation5 [shape = 's32[1]{0}', space=sflag, size = 0x4, scoped, tag = 'scoped memory for tpu_custom_call.1']
    #allocation6 [shape = 'u8[32768]{0}', space=vmem, size = 0x8000, scoped, tag = 'input window, operand 1, single buffered']
    #allocation7 [shape = 's32[1]{0}', space=sflag, size = 0x4, scoped, tag = 'scoped memory for tpu_custom_call.1']
    #allocation8 [shape = 'u8[32768]{0}', space=vmem, size = 0x8000, scoped, tag = 'input window, operand 2, single buffered']
    #allocation9 [shape = 'u8[32768]{0}', space=vmem, size = 0x8000, scoped, tag = 'input window, operand 4, single buffered']
    #allocation10 [shape = 's32[1]{0}', space=sflag, size = 0x4, scoped, tag = 'scoped memory for tpu_custom_call.1']
    #allocation11 [shape = 'u8[32768]{0}', space=vmem, size = 0x8000, scoped, tag = 'input window, operand 6, single buffered']
    #allocation12 [shape = 'u8[4096]{0}', space=vmem, size = 0x1000, scoped, tag = 'output window, operand 0, single buffered']
    %13 = vsyncpa [#allocation4], 0
    %14 = vsyncpa [#allocation7], 0
    %15 = vsyncpa [#allocation10], 0
    %16 = vsyncpa [#allocation5], 0
    // Predicated region
    $region2: #{tpu_custom_call.1} parent=1 // pred_check
      _
    $region3: #{tpu_custom_call.1} parent=1 // pred_check_branch
      %18 = sbr.rel (0) target = $region5
    $region4: #{tpu_custom_call.1} parent=1 // pred_region
      %20 = vsyncadd [#allocation4], 0
      %s22 = sshll.u32 %s0, 4
      %s23 = int_to_ptr.hbm [resolvable:$true] %s22
      %s24 = sshll.u32 [#allocation3], 4
      %s25 = int_to_ptr.vmem [resolvable:$true] %s24
      %27 = dma.hbm_to_vmem [thread:$0]  %s23, 128, %s25, [#allocation4]
    $region5: #{tpu_custom_call.1} parent=1 // pred_fallthru
      _
    // Predicated region
    $region6: #{tpu_custom_call.1} parent=1 // pred_check
      _
    $region7: #{tpu_custom_call.1} parent=1 // pred_check_branch
      %29 = sbr.rel (0) target = $region9
    $region8: #{tpu_custom_call.1} parent=1 // pred_region
      %31 = vsyncadd [#allocation7], 0
      %s32 = sshll.u32 %s1, 4
      %s33 = int_to_ptr.hbm [resolvable:$true] %s32
      %s34 = sshll.u32 [#allocation6], 4
      %s35 = int_to_ptr.vmem [resolvable:$true] %s34
      %40 = dma.hbm_to_vmem [thread:$0]  %s33, 1024, %s35, [#allocation7], 64, 64, 4
    $region9: #{tpu_custom_call.1} parent=1 // pred_fallthru
      _
    // Predicated region
    $region10: #{tpu_custom_call.1} parent=1 // pred_check
      _
    $region11: #{tpu_custom_call.1} parent=1 // pred_check_branch
      %42 = sbr.rel (0) target = $region13
    $region12: #{tpu_custom_call.1} parent=1 // pred_region
      %44 = vsyncadd [#allocation7], 0
      %s45 = sshll.u32 %s2, 4
      %s46 = int_to_ptr.hbm [resolvable:$true] %s45
      %s47 = sshll.u32 [#allocation8], 4
      %s48 = int_to_ptr.vmem [resolvable:$true] %s47
      %53 = dma.hbm_to_vmem [thread:$0]  %s46, 1024, %s48, [#allocation7], 64, 64, 4
    $region13: #{tpu_custom_call.1} parent=1 // pred_fallthru
      _
    // Predicated region
    $region14: #{tpu_custom_call.1} parent=1 // pred_check
      _
    $region15: #{tpu_custom_call.1} parent=1 // pred_check_branch
      %55 = sbr.rel (0) target = $region17
    $region16: #{tpu_custom_call.1} parent=1 // pred_region
      _
    $region17: #{tpu_custom_call.1} parent=1 // pred_fallthru
      _
    // Predicated region
    $region18: #{tpu_custom_call.1} parent=1 // pred_check
      _
    $region19: #{tpu_custom_call.1} parent=1 // pred_check_branch
      %57 = sbr.rel (0) target = $region21
    $region20: #{tpu_custom_call.1} parent=1 // pred_region
      %59 = vsyncadd [#allocation10], 0
      %s60 = sshll.u32 %s4, 4
      %s61 = int_to_ptr.hbm [resolvable:$true] %s60
      %s62 = sshll.u32 [#allocation9], 4
      %s63 = int_to_ptr.vmem [resolvable:$true] %s62
      %68 = dma.hbm_to_vmem [thread:$0]  %s61, 1024, %s63, [#allocation10], 64, 64, 4
    $region21: #{tpu_custom_call.1} parent=1 // pred_fallthru
      _
    // Predicated region
    $region22: #{tpu_custom_call.1} parent=1 // pred_check
      _
    $region23: #{tpu_custom_call.1} parent=1 // pred_check_branch
      %70 = sbr.rel (0) target = $region25
    $region24: #{tpu_custom_call.1} parent=1 // pred_region
      _
    $region25: #{tpu_custom_call.1} parent=1 // pred_fallthru
      _
    // Predicated region
    $region26: #{tpu_custom_call.1} parent=1 // pred_check
      _
    $region27: #{tpu_custom_call.1} parent=1 // pred_check_branch
      %72 = sbr.rel (0) target = $region29
    $region28: #{tpu_custom_call.1} parent=1 // pred_region
      %74 = vsyncadd [#allocation10], 0
      %s75 = sshll.u32 %s6, 4
      %s76 = int_to_ptr.hbm [resolvable:$true] %s75
      %s77 = sshll.u32 [#allocation11], 4
      %s78 = int_to_ptr.vmem [resolvable:$true] %s77
      %83 = dma.hbm_to_vmem [thread:$0]  %s76, 1024, %s78, [#allocation10], 64, 64, 4
    $region29: #{tpu_custom_call.1} parent=1 // pred_fallthru
      _
    // Predicated region
    $region30: #{tpu_custom_call.1} parent=1 // pred_check
      _
    $region31: #{tpu_custom_call.1} parent=1 // pred_check_branch
      %85 = sbr.rel (0) target = $region33
    $region32: #{tpu_custom_call.1} parent=1 // pred_region
      _
    $region33: #{tpu_custom_call.1} parent=1 // pred_fallthru
      _
    // Predicated region
    $region34: #{tpu_custom_call.1} parent=1 // pred_check
      _
    $region35: #{tpu_custom_call.1} parent=1 // pred_check_branch
      %87 = sbr.rel (0) target = $region37
    $region36: #{tpu_custom_call.1} parent=1 // pred_region
      %89 = dma.done [#allocation4], 128
    $region37: #{tpu_custom_call.1} parent=1 // pred_fallthru
      _
    // Predicated region
    $region38: #{tpu_custom_call.1} parent=1 // pred_check
      _
    $region39: #{tpu_custom_call.1} parent=1 // pred_check_branch
      %91 = sbr.rel (0) target = $region41
    $region40: #{tpu_custom_call.1} parent=1 // pred_region
      %93 = dma.done [#allocation7], 1024
    $region41: #{tpu_custom_call.1} parent=1 // pred_fallthru
      _
    // Predicated region
    $region42: #{tpu_custom_call.1} parent=1 // pred_check
      _
    $region43: #{tpu_custom_call.1} parent=1 // pred_check_branch
      %95 = sbr.rel (0) target = $region45
    $region44: #{tpu_custom_call.1} parent=1 // pred_region
      %97 = dma.done [#allocation7], 1024
    $region45: #{tpu_custom_call.1} parent=1 // pred_fallthru
      _
    // Predicated region
    $region46: #{tpu_custom_call.1} parent=1 // pred_check
      _
    $region47: #{tpu_custom_call.1} parent=1 // pred_check_branch
      %99 = sbr.rel (0) target = $region49
    $region48: #{tpu_custom_call.1} parent=1 // pred_region
      %101 = dma.done [#allocation10], 1024
    $region49: #{tpu_custom_call.1} parent=1 // pred_fallthru
      _
    // Predicated region
    $region50: #{tpu_custom_call.1} parent=1 // pred_check
      _
    $region51: #{tpu_custom_call.1} parent=1 // pred_check_branch
      %103 = sbr.rel (0) target = $region53
    $region52: #{tpu_custom_call.1} parent=1 // pred_region
      %105 = dma.done [#allocation10], 1024
    $region53: #{tpu_custom_call.1} parent=1 // pred_fallthru
      _
    %p106 = scmp.eq.s32.totalorder 0, 0
    // Predicated region
    $region54: #{tpu_custom_call.1} parent=1 // pred_check
      %p107 = pneg %p106
    $region55: #{tpu_custom_call.1} parent=1 // pred_check_branch
      %109 = sbr.rel (%p107) target = $region57
    $region56: #{tpu_custom_call.1} parent=1 // pred_region
      %110 = vst [vmem:[#allocation2] sm:$0xff] 0.0
    $region57: #{tpu_custom_call.1} parent=1 // pred_fallthru
      _
    %v111 = vld [vmem:[#allocation3] sm:$0xff]
    %s112 = smul.u32 0, 128
    %v113 = vlaneseq
    %v114 = vand.u32 %v113, 127
    %v115 = vstv %s112
    %v116 = vadd.s32 %v114, %v115
    %117 = vset.pattern.permute.xlu0 0
    %118 = vperm.xlu0 %117, %v111
    %v119 = vpop.permute.xlu0 %118
    %vm120 = vcmp.eq.s32.totalorder %v119, %v116
    %v121 = vsel %vm120, 1, 0
    %122 = vset.pattern.permute.xlu0 1
    %123 = vperm.xlu0 %122, %v111
    %v124 = vpop.permute.xlu0 %123
    %vm125 = vcmp.eq.s32.totalorder %v124, %v116
    %v126 = vsel %vm125, 1, 0
    %127 = vset.pattern.permute.xlu0 2
    %128 = vperm.xlu0 %127, %v111
    %v129 = vpop.permute.xlu0 %128
    %vm130 = vcmp.eq.s32.totalorder %v129, %v116
    %v131 = vsel %vm130, 1, 0
    %132 = vset.pattern.permute.xlu0 3
    %133 = vperm.xlu0 %132, %v111
    %v134 = vpop.permute.xlu0 %133
    %vm135 = vcmp.eq.s32.totalorder %v134, %v116
    %v136 = vsel %vm135, 1, 0
    %137 = vset.pattern.permute.xlu0 4
    %138 = vperm.xlu0 %137, %v111
    %v139 = vpop.permute.xlu0 %138
    %vm140 = vcmp.eq.s32.totalorder %v139, %v116
    %v141 = vsel %vm140, 1, 0
    %v142 = vadd.s32 %v121, %v141
    %143 = vset.pattern.permute.xlu0 5
    %144 = vperm.xlu0 %143, %v111
    %v145 = vpop.permute.xlu0 %144
    %vm146 = vcmp.eq.s32.totalorder %v145, %v116
    %v147 = vsel %vm146, 1, 0
    %v148 = vadd.s32 %v126, %v147
    %149 = vset.pattern.permute.xlu0 6
    %150 = vperm.xlu0 %149, %v111
    %v151 = vpop.permute.xlu0 %150
    %vm152 = vcmp.eq.s32.totalorder %v151, %v116
    %v153 = vsel %vm152, 1, 0
    %v154 = vadd.s32 %v131, %v153
    %155 = vset.pattern.permute.xlu0 7
    %156 = vperm.xlu0 %155, %v111
    %v157 = vpop.permute.xlu0 %156
    %vm158 = vcmp.eq.s32.totalorder %v157, %v116
    %v159 = vsel %vm158, 1, 0
    %v160 = vadd.s32 %v136, %v159
    %v161 = vadd.s32 %v142, %v148
    %v162 = vadd.s32 %v161, %v154
    %v163 = vadd.s32 %v162, %v160
    %v164 = vld [vmem:[#allocation2] sm:$0xff]
    %v165 = vcvt.s32.f32 %v163
    %v166 = vpack.c.bf16 %v165, %v165
    %v167 = vld [vmem:[#allocation6] sm:$0xf]
    %v168 = vld [vmem:[#allocation6 + $0x4] sm:$0xf]
    %v169 = vld [vmem:[#allocation6 + $0x8] sm:$0xf]
    %v170 = vld [vmem:[#allocation6 + $0xc] sm:$0xf]
    %v171 = vld [vmem:[#allocation6 + $0x10] sm:$0xf]
    %v172 = vld [vmem:[#allocation6 + $0x14] sm:$0xf]
    %v173 = vld [vmem:[#allocation6 + $0x18] sm:$0xf]
    %v174 = vld [vmem:[#allocation6 + $0x1c] sm:$0xf]
    %v175 = vld [vmem:[#allocation6 + $0x20] sm:$0xf]
    %v176 = vld [vmem:[#allocation6 + $0x24] sm:$0xf]
    %v177 = vld [vmem:[#allocation6 + $0x28] sm:$0xf]
    %v178 = vld [vmem:[#allocation6 + $0x2c] sm:$0xf]
    %v179 = vld [vmem:[#allocation6 + $0x30] sm:$0xf]
    %v180 = vld [vmem:[#allocation6 + $0x34] sm:$0xf]
    %v181 = vld [vmem:[#allocation6 + $0x38] sm:$0xf]
    %v182 = vld [vmem:[#allocation6 + $0x3c] sm:$0xf]
    %v199 = vunpack.c.l.b16 %v167
    %v200 = vunpack.c.l.b16 %v168
    %v201 = vunpack.c.l.b16 %v169
    %v202 = vunpack.c.l.b16 %v170
    %v203 = vunpack.c.l.b16 %v171
    %v204 = vunpack.c.l.b16 %v172
    %v205 = vunpack.c.l.b16 %v173
    %v206 = vunpack.c.l.b16 %v174
    %v207 = vunpack.c.l.b16 %v175
    %v208 = vunpack.c.l.b16 %v176
    %v209 = vunpack.c.l.b16 %v177
    %v210 = vunpack.c.l.b16 %v178
    %v211 = vunpack.c.l.b16 %v179
    %v212 = vunpack.c.l.b16 %v180
    %v213 = vunpack.c.l.b16 %v181
    %v214 = vunpack.c.l.b16 %v182
    %v215 = vpack.c.b16 %v200, %v199
    %v216 = vpack.c.b16 %v202, %v201
    %v217 = vpack.c.b16 %v204, %v203
    %v218 = vpack.c.b16 %v206, %v205
    %v219 = vpack.c.b16 %v208, %v207
    %v220 = vpack.c.b16 %v210, %v209
    %v221 = vpack.c.b16 %v212, %v211
    %v222 = vpack.c.b16 %v214, %v213
    %231 = vmatpush.bf16.msra.mxu0 %v222
    %232 = vmatpush.bf16.msra.mxu0 %v221
    %233 = vmatpush.bf16.msra.mxu0 %v220
    %234 = vmatpush.bf16.msra.mxu0 %v219
    %235 = vmatpush.bf16.msra.mxu0 %v218
    %236 = vmatpush.bf16.msra.mxu0 %v217
    %237 = vmatpush.bf16.msra.mxu0 %v216
    %238 = vmatpush.bf16.msra.mxu0 %v215
    %239 = vmatmul.bf16.gmra.mxu0 %v166
    %v240 = vpop.f32.mrf.mxu0
    %v241 = vadd.f32 0.0, %v240
    %v242 = vpop.f32.mrf.mxu0
    %243 = vdwg.mxu0
    %v244 = vadd.f32 %v164, %v241
    %245 = vst [vmem:[#allocation2] sm:$0xff] %v244
    // Predicated region
    $region58: #{tpu_custom_call.1} parent=1 // pred_check
      %p246 = pneg %p106
    $region59: #{tpu_custom_call.1} parent=1 // pred_check_branch
      %248 = sbr.rel (%p246) target = $region61
    $region60: #{tpu_custom_call.1} parent=1 // pred_region
      %v249 = vld [vmem:[#allocation2] sm:$0xff]
      %v250 = vmul.f32 %v249, 0.125
      %v251 = vpack.c.bf16 %v250, %v250
      %v252 = vld [vmem:[#allocation8] sm:$0xf]
      %v253 = vld [vmem:[#allocation8 + $0x4] sm:$0xf]
      %v254 = vld [vmem:[#allocation8 + $0x8] sm:$0xf]
      %v255 = vld [vmem:[#allocation8 + $0xc] sm:$0xf]
      %v256 = vld [vmem:[#allocation8 + $0x10] sm:$0xf]
      %v257 = vld [vmem:[#allocation8 + $0x14] sm:$0xf]
      %v258 = vld [vmem:[#allocation8 + $0x18] sm:$0xf]
      %v259 = vld [vmem:[#allocation8 + $0x1c] sm:$0xf]
      %v260 = vld [vmem:[#allocation8 + $0x20] sm:$0xf]
      %v261 = vld [vmem:[#allocation8 + $0x24] sm:$0xf]
      %v262 = vld [vmem:[#allocation8 + $0x28] sm:$0xf]
      %v263 = vld [vmem:[#allocation8 + $0x2c] sm:$0xf]
      %v264 = vld [vmem:[#allocation8 + $0x30] sm:$0xf]
      %v265 = vld [vmem:[#allocation8 + $0x34] sm:$0xf]
      %v266 = vld [vmem:[#allocation8 + $0x38] sm:$0xf]
      %v267 = vld [vmem:[#allocation8 + $0x3c] sm:$0xf]
      %v268 = vld [vmem:[%s3] sm:$0x1]
      %v270 = vperm.slane %v268, 0
      %v288 = vunpack.c.l.b16 %v252
      %v289 = vunpack.c.l.b16 %v253
      %v290 = vunpack.c.l.b16 %v254
      %v291 = vunpack.c.l.b16 %v255
      %v292 = vunpack.c.l.b16 %v256
      %v293 = vunpack.c.l.b16 %v257
      %v294 = vunpack.c.l.b16 %v258
      %v295 = vunpack.c.l.b16 %v259
      %v296 = vunpack.c.l.b16 %v260
      %v297 = vunpack.c.l.b16 %v261
      %v298 = vunpack.c.l.b16 %v262
      %v299 = vunpack.c.l.b16 %v263
      %v300 = vunpack.c.l.b16 %v264
      %v301 = vunpack.c.l.b16 %v265
      %v302 = vunpack.c.l.b16 %v266
      %v303 = vunpack.c.l.b16 %v267
      %v304 = vpack.c.b16 %v289, %v288
      %v305 = vpack.c.b16 %v291, %v290
      %v306 = vpack.c.b16 %v293, %v292
      %v307 = vpack.c.b16 %v295, %v294
      %v308 = vpack.c.b16 %v297, %v296
      %v309 = vpack.c.b16 %v299, %v298
      %v310 = vpack.c.b16 %v301, %v300
      %v311 = vpack.c.b16 %v303, %v302
      %320 = vmatpush.bf16.msra.mxu0 %v311
      %321 = vmatpush.bf16.msra.mxu0 %v310
      %322 = vmatpush.bf16.msra.mxu0 %v309
      %323 = vmatpush.bf16.msra.mxu0 %v308
      %324 = vmatpush.bf16.msra.mxu0 %v307
      %325 = vmatpush.bf16.msra.mxu0 %v306
      %326 = vmatpush.bf16.msra.mxu0 %v305
      %327 = vmatpush.bf16.msra.mxu0 %v304
      %328 = vmatmul.bf16.gmra.mxu0 %v251
      %v329 = vpop.f32.mrf.mxu0
      %v330 = vadd.f32 %v270, %v329
      %v331 = vpop.f32.mrf.mxu0
      %332 = vdwg.mxu0
      %v333 = vmax.f32 %v330, 0.0
      %v334 = vpack.c.bf16 %v333, %v333
      %v335 = vld [vmem:[#allocation9] sm:$0xf]
      %v336 = vld [vmem:[#allocation9 + $0x4] sm:$0xf]
      %v337 = vld [vmem:[#allocation9 + $0x8] sm:$0xf]
      %v338 = vld [vmem:[#allocation9 + $0xc] sm:$0xf]
      %v339 = vld [vmem:[#allocation9 + $0x10] sm:$0xf]
      %v340 = vld [vmem:[#allocation9 + $0x14] sm:$0xf]
      %v341 = vld [vmem:[#allocation9 + $0x18] sm:$0xf]
      %v342 = vld [vmem:[#allocation9 + $0x1c] sm:$0xf]
      %v343 = vld [vmem:[#allocation9 + $0x20] sm:$0xf]
      %v344 = vld [vmem:[#allocation9 + $0x24] sm:$0xf]
      %v345 = vld [vmem:[#allocation9 + $0x28] sm:$0xf]
      %v346 = vld [vmem:[#allocation9 + $0x2c] sm:$0xf]
      %v347 = vld [vmem:[#allocation9 + $0x30] sm:$0xf]
      %v348 = vld [vmem:[#allocation9 + $0x34] sm:$0xf]
      %v349 = vld [vmem:[#allocation9 + $0x38] sm:$0xf]
      %v350 = vld [vmem:[#allocation9 + $0x3c] sm:$0xf]
      %v351 = vld [vmem:[%s5] sm:$0x1]
      %v353 = vperm.slane %v351, 0
      %v371 = vunpack.c.l.b16 %v335
      %v372 = vunpack.c.l.b16 %v336
      %v373 = vunpack.c.l.b16 %v337
      %v374 = vunpack.c.l.b16 %v338
      %v375 = vunpack.c.l.b16 %v339
      %v376 = vunpack.c.l.b16 %v340
      %v377 = vunpack.c.l.b16 %v341
      %v378 = vunpack.c.l.b16 %v342
      %v379 = vunpack.c.l.b16 %v343
      %v380 = vunpack.c.l.b16 %v344
      %v381 = vunpack.c.l.b16 %v345
      %v382 = vunpack.c.l.b16 %v346
      %v383 = vunpack.c.l.b16 %v347
      %v384 = vunpack.c.l.b16 %v348
      %v385 = vunpack.c.l.b16 %v349
      %v386 = vunpack.c.l.b16 %v350
      %v387 = vpack.c.b16 %v372, %v371
      %v388 = vpack.c.b16 %v374, %v373
      %v389 = vpack.c.b16 %v376, %v375
      %v390 = vpack.c.b16 %v378, %v377
      %v391 = vpack.c.b16 %v380, %v379
      %v392 = vpack.c.b16 %v382, %v381
      %v393 = vpack.c.b16 %v384, %v383
      %v394 = vpack.c.b16 %v386, %v385
      %403 = vmatpush.bf16.msra.mxu0 %v394
      %404 = vmatpush.bf16.msra.mxu0 %v393
      %405 = vmatpush.bf16.msra.mxu0 %v392
      %406 = vmatpush.bf16.msra.mxu0 %v391
      %407 = vmatpush.bf16.msra.mxu0 %v390
      %408 = vmatpush.bf16.msra.mxu0 %v389
      %409 = vmatpush.bf16.msra.mxu0 %v388
      %410 = vmatpush.bf16.msra.mxu0 %v387
      %411 = vmatmul.bf16.gmra.mxu0 %v334
      %v412 = vpop.f32.mrf.mxu0
      %v413 = vadd.f32 %v353, %v412
      %v414 = vpop.f32.mrf.mxu0
      %415 = vdwg.mxu0
      %v416 = vmax.f32 %v413, 0.0
      %v417 = vpack.c.bf16 %v416, %v416
      %v418 = vld [vmem:[#allocation11] sm:$0xf]
      %v419 = vld [vmem:[#allocation11 + $0x4] sm:$0xf]
      %v420 = vld [vmem:[#allocation11 + $0x8] sm:$0xf]
      %v421 = vld [vmem:[#allocation11 + $0xc] sm:$0xf]
      %v422 = vld [vmem:[#allocation11 + $0x10] sm:$0xf]
      %v423 = vld [vmem:[#allocation11 + $0x14] sm:$0xf]
      %v424 = vld [vmem:[#allocation11 + $0x18] sm:$0xf]
      %v425 = vld [vmem:[#allocation11 + $0x1c] sm:$0xf]
      %v426 = vld [vmem:[#allocation11 + $0x20] sm:$0xf]
      %v427 = vld [vmem:[#allocation11 + $0x24] sm:$0xf]
      %v428 = vld [vmem:[#allocation11 + $0x28] sm:$0xf]
      %v429 = vld [vmem:[#allocation11 + $0x2c] sm:$0xf]
      %v430 = vld [vmem:[#allocation11 + $0x30] sm:$0xf]
      %v431 = vld [vmem:[#allocation11 + $0x34] sm:$0xf]
      %v432 = vld [vmem:[#allocation11 + $0x38] sm:$0xf]
      %v433 = vld [vmem:[#allocation11 + $0x3c] sm:$0xf]
      %v434 = vld [vmem:[%s7] sm:$0x1]
      %v436 = vperm.slane %v434, 0
      %v454 = vunpack.c.l.b16 %v418
      %v455 = vunpack.c.l.b16 %v419
      %v456 = vunpack.c.l.b16 %v420
      %v457 = vunpack.c.l.b16 %v421
      %v458 = vunpack.c.l.b16 %v422
      %v459 = vunpack.c.l.b16 %v423
      %v460 = vunpack.c.l.b16 %v424
      %v461 = vunpack.c.l.b16 %v425
      %v462 = vunpack.c.l.b16 %v426
      %v463 = vunpack.c.l.b16 %v427
      %v464 = vunpack.c.l.b16 %v428
      %v465 = vunpack.c.l.b16 %v429
      %v466 = vunpack.c.l.b16 %v430
      %v467 = vunpack.c.l.b16 %v431
      %v468 = vunpack.c.l.b16 %v432
      %v469 = vunpack.c.l.b16 %v433
      %v470 = vpack.c.b16 %v455, %v454
      %v471 = vpack.c.b16 %v457, %v456
      %v472 = vpack.c.b16 %v459, %v458
      %v473 = vpack.c.b16 %v461, %v460
      %v474 = vpack.c.b16 %v463, %v462
      %v475 = vpack.c.b16 %v465, %v464
      %v476 = vpack.c.b16 %v467, %v466
      %v477 = vpack.c.b16 %v469, %v468
      %486 = vmatpush.bf16.msra.mxu0 %v477
      %487 = vmatpush.bf16.msra.mxu0 %v476
      %488 = vmatpush.bf16.msra.mxu0 %v475
      %489 = vmatpush.bf16.msra.mxu0 %v474
      %490 = vmatpush.bf16.msra.mxu0 %v473
      %491 = vmatpush.bf16.msra.mxu0 %v472
      %492 = vmatpush.bf16.msra.mxu0 %v471
      %493 = vmatpush.bf16.msra.mxu0 %v470
      %494 = vmatmul.bf16.gmra.mxu0 %v417
      %v495 = vpop.f32.mrf.mxu0
      %v496 = vadd.f32 %v436, %v495
      %v497 = vpop.f32.mrf.mxu0
      %498 = vdwg.mxu0
      %499 = vst [vmem:[#allocation12] sm:$0xff] %v496
    $region61: #{tpu_custom_call.1} parent=1 // pred_fallthru
      _
    // Predicated region
    $region62: #{tpu_custom_call.1} parent=1 // pred_check
      _
    $region63: #{tpu_custom_call.1} parent=1 // pred_check_branch
      %501 = sbr.rel (0) target = $region65
    $region64: #{tpu_custom_call.1} parent=1 // pred_region
      %503 = vsyncadd [#allocation5], 0
      %s505 = sshll.u32 [#allocation12], 4
      %s506 = int_to_ptr.vmem [resolvable:$true] %s505
      %s507 = sshll.u32 %s8, 4
      %s508 = int_to_ptr.hbm [resolvable:$true] %s507
      %510 = dma.vmem_to_hbm [thread:$0]  %s506, 128, %s508, [#allocation5]
    $region65: #{tpu_custom_call.1} parent=1 // pred_fallthru
      _
    // Predicated region
    $region66: #{tpu_custom_call.1} parent=1 // pred_check
      _
    $region67: #{tpu_custom_call.1} parent=1 // pred_check_branch
      %512 = sbr.rel (0) target = $region69
    $region68: #{tpu_custom_call.1} parent=1 // pred_region
      %514 = dma.done [#allocation5], 128
    $region69: #{tpu_custom_call.1} parent=1 // pred_fallthru
      _
    %515 = vsyncpa [#allocation4], 1
    %516 = vsyncpa [#allocation7], 1
    %517 = vsyncpa [#allocation10], 1
    %518 = vsyncpa [#allocation5], 1

</llo_original>
